<compile_context>
chip_gen: v6e
topology: v6e:2x2x1
jax: 0.10.0
libtpu: 0.0.40
codegen_flags: <defaults>
</compile_context>

<pallas_src>
import functools

import jax
import jax.numpy as jnp
import numpy as np
from jax.experimental import pallas as pl
from jax.experimental.pallas import tpu as pltpu


def se_block_kernel(x_ref, w_ref, out_ref, *, hidden, inv_hw):
    # x_ref block: (Nb, C, HWpad).  Padded lanes are zero, so they do not
    # perturb the sum; we divide by the *true* H*W.
    m = jnp.sum(x_ref[...].astype(jnp.float32), axis=2) * inv_hw     # (Nb, C)

    # Single weight buffer: [: , :hidden] = W1.T (C, hidden),
    #                       [: , hidden:] = W2   (C, hidden).
    w1t = w_ref[:, :hidden].astype(jnp.float32)                      # (C, h)
    w2 = w_ref[:, hidden:].astype(jnp.float32)                       # (C, h)

    # fc1 + ReLU: h[n, j] = relu(sum_c m[n, c] * W1[j, c])
    # Done as broadcast-multiply + sublane reduction (no MXU underfeeding,
    # no transposes) across the whole batch block at once.
    h = jnp.sum(m[:, :, None] * w1t[None, :, :], axis=1)             # (Nb, h)
    h = jnp.maximum(h, 0.0)

    # fc2: z[n, c] = sum_j W2[c, j] * h[n, j]   (lane reduction)
    z = jnp.sum(w2[None, :, :] * h[:, None, :], axis=2)              # (Nb, C)

    # Sigmoid: exp and the reciprocal both issue on the EUP slot.
    s = pl.reciprocal(1.0 + jnp.exp(-z), approx=True)                # (Nb, C)

    # Gate: re-read the tile from VMEM (spare vld slots) rather than keeping
    # it live in vregs across the reductions; multiply in the input dtype.
    x = x_ref[...]
    out_ref[...] = x * s[:, :, None].astype(x.dtype)


def prepare_se_weights(w1, w2):
    """One-time weight prep (outside the per-call hot path).

    w1: (hidden, C) for nn.Linear(C, hidden, bias=False)
    w2: (C, hidden) for nn.Linear(hidden, C, bias=False)
    Returns a single (C, 2*hidden) array  [ W1.T | W2 ].
    """
    return jnp.concatenate([jnp.transpose(w1), w2], axis=1)


def se_block_forward(x_nchw, w_cat, *, hidden=4, target_block_bytes=1 << 20):
    """x_nchw: (N, C, H, W); w_cat: (C, 2*hidden) from prepare_se_weights."""
    N, C, H, W = x_nchw.shape
    hw = H * W
    hw_pad = ((hw + 127) // 128) * 128                # lane-dense stores

    x = x_nchw.reshape(N, C, hw)                      # free reshape, no transpose
    if hw_pad != hw:
        x = jnp.pad(x, ((0, 0), (0, 0), (0, hw_pad - hw)))   # zeros: pool-safe

    # Batch-block size: as many samples per grid step as fit ~target bytes,
    # and a divisor of N so the grid tiles exactly.
    per_sample = C * hw_pad * x.dtype.itemsize
    nb = max(1, min(N, target_block_bytes // max(per_sample, 1)))
    while N % nb:
        nb -= 1

    kernel = functools.partial(se_block_kernel, hidden=hidden, inv_hw=1.0 / hw)

    out = pl.pallas_call(
        kernel,
        out_shape=jax.ShapeDtypeStruct((N, C, hw_pad), x.dtype),
        grid_spec=pltpu.PrefetchScalarGridSpec(
            num_scalar_prefetch=0,
            grid=(N // nb,),
            in_specs=[
                pl.BlockSpec((nb, C, hw_pad), lambda b: (b, 0, 0)),
                pl.BlockSpec((C, 2 * hidden), lambda b: (0, 0)),
            ],
            out_specs=pl.BlockSpec((nb, C, hw_pad), lambda b: (b, 0, 0)),
        ),
        # With grid=1 (tiny problems) this is a no-op; with larger N it
        # shards batch blocks across v7x's two TensorCores.
        compiler_params=pltpu.CompilerParams(
            dimension_semantics=("parallel",)),
    )(x, w_cat)

    if hw_pad != hw:
        out = out[:, :, :hw]
    return out.reshape(N, C, H, W)


def _reference(x, w1, w2):
    """Pure-JAX reference matching the PyTorch module."""
    y = jnp.mean(x, axis=(2, 3))                            # (N, C)
    h = jnp.maximum(y @ w1.T, 0.0)                          # (N, hidden)
    s = 1.0 / (1.0 + jnp.exp(-(h @ w2.T)))                  # (N, C)
    return x * s[:, :, None, None]


def init_params(key, n_feats, hidden=4):
    k1, k2 = jax.random.split(key)
    # nn.Linear(n_feats, 4, bias=False) -> weight (4, n_feats)
    w1 = jax.random.normal(k1, (hidden, n_feats), jnp.float32) * 0.5
    # nn.Linear(4, n_feats, bias=False) -> weight (n_feats, 4)
    w2 = jax.random.normal(k2, (n_feats, hidden), jnp.float32) * 0.5
    return w1, w2


if __name__ == "__main__":
    # Small shapes consistent with the module: N=2, n_feats=4, H=W=16.
    n_feats = 4
    key = jax.random.PRNGKey(0)
    kx, kp = jax.random.split(key)
    x = jax.random.normal(kx, (2, n_feats, 16, 16), jnp.float32)   # NCHW
    w1, w2 = init_params(kp, n_feats)

    w_cat = prepare_se_weights(w1, w2)          # one-time weight prep
    out = jax.block_until_ready(se_block_forward(x, w_cat, hidden=4))
    ref = jax.block_until_ready(_reference(x, w1, w2))

    # Tolerance accounts for the hardware approximate reciprocal (EUP vrcp)
    # used in the sigmoid; semantics are otherwise identical to the module.
    np.testing.assert_allclose(np.asarray(out), np.asarray(ref),
                               rtol=2e-2, atol=2e-2)

    print("KERNEL_OK")
</pallas_src>

<mosaic_0001>
module attributes {stable_mosaic.version = 11 : i64} {
  func.func @se_block_kernel(%arg0: i32, %arg1: memref<2x4x256xf32, #tpu.memory_space<vmem>>, %arg2: memref<4x8xf32, #tpu.memory_space<vmem>>, %arg3: memref<2x4x256xf32, #tpu.memory_space<vmem>>) attributes {dimension_semantics = [#tpu.dimension_semantics<parallel>], iteration_bounds = array<i64: 1>, scalar_prefetch = 0 : i64, scratch_operands = 0 : i64, tpu.core_type = #tpu.core_type<tc>, window_params = [{transform_indices = @transform_0, window_bounds = array<i64: 2, 4, 256>}, {pipeline_mode = #tpu.pipeline_mode<synchronous>, transform_indices = @transform_1, window_bounds = array<i64: 4, 8>}, {transform_indices = @transform_2, window_bounds = array<i64: 2, 4, 256>}]} {
    %c0 = arith.constant 0 : index
    %c0_0 = arith.constant 0 : index
    %c0_1 = arith.constant 0 : index
    %0 = vector.load %arg1[%c0, %c0_0, %c0_1] : memref<2x4x256xf32, #tpu.memory_space<vmem>>, vector<2x4x256xf32>
    %cst = arith.constant dense<0.000000e+00> : vector<2x4xf32>
    %1 = vector.multi_reduction <add>, %0, %cst [2] : vector<2x4x256xf32> to vector<2x4xf32>
    %cst_2 = arith.constant 3.906250e-03 : f32
    %2 = vector.broadcast %cst_2 : f32 to vector<2x4xf32>
    %3 = arith.mulf %1, %2 : vector<2x4xf32>
    %c0_3 = arith.constant 0 : index
    %c0_4 = arith.constant 0 : index
    %4 = vector.load %arg2[%c0_3, %c0_4] : memref<4x8xf32, #tpu.memory_space<vmem>>, vector<4x4xf32>
    %c0_5 = arith.constant 0 : index
    %c4 = arith.constant 4 : index
    %5 = vector.load %arg2[%c0_5, %c4] : memref<4x8xf32, #tpu.memory_space<vmem>>, vector<4x4xf32>
    %6 = vector.shape_cast %3 : vector<2x4xf32> to vector<2x4x1xf32>
    %7 = vector.shape_cast %4 : vector<4x4xf32> to vector<1x4x4xf32>
    %8 = vector.broadcast %6 : vector<2x4x1xf32> to vector<2x4x4xf32>
    %9 = vector.broadcast %7 : vector<1x4x4xf32> to vector<2x4x4xf32>
    %10 = arith.mulf %8, %9 : vector<2x4x4xf32>
    %cst_6 = arith.constant dense<0.000000e+00> : vector<2x4xf32>
    %11 = vector.multi_reduction <add>, %10, %cst_6 [1] : vector<2x4x4xf32> to vector<2x4xf32>
    %cst_7 = arith.constant 0.000000e+00 : f32
    %12 = vector.broadcast %cst_7 : f32 to vector<2x4xf32>
    %13 = arith.maximumf %11, %12 : vector<2x4xf32>
    %14 = vector.shape_cast %5 : vector<4x4xf32> to vector<1x4x4xf32>
    %15 = vector.shape_cast %13 : vector<2x4xf32> to vector<2x1x4xf32>
    %16 = vector.broadcast %14 : vector<1x4x4xf32> to vector<2x4x4xf32>
    %17 = vector.broadcast %15 : vector<2x1x4xf32> to vector<2x4x4xf32>
    %18 = arith.mulf %16, %17 : vector<2x4x4xf32>
    %cst_8 = arith.constant dense<0.000000e+00> : vector<2x4xf32>
    %19 = vector.multi_reduction <add>, %18, %cst_8 [2] : vector<2x4x4xf32> to vector<2x4xf32>
    %cst_9 = arith.constant 0.000000e+00 : f32
    %20 = vector.broadcast %cst_9 : f32 to vector<2x4xf32>
    %21 = arith.subf %20, %19 : vector<2x4xf32>
    %22 = math.exp %21 : vector<2x4xf32>
    %cst_10 = arith.constant 1.000000e+00 : f32
    %23 = vector.broadcast %cst_10 : f32 to vector<2x4xf32>
    %24 = arith.addf %23, %22 : vector<2x4xf32>
    %25 = tpu.reciprocal %24 {approx = true} : vector<2x4xf32> -> vector<2x4xf32>
    %c0_11 = arith.constant 0 : index
    %c0_12 = arith.constant 0 : index
    %c0_13 = arith.constant 0 : index
    %26 = vector.load %arg1[%c0_11, %c0_12, %c0_13] : memref<2x4x256xf32, #tpu.memory_space<vmem>>, vector<2x4x256xf32>
    %27 = vector.shape_cast %25 : vector<2x4xf32> to vector<2x4x1xf32>
    %28 = vector.broadcast %27 : vector<2x4x1xf32> to vector<2x4x256xf32>
    %29 = arith.mulf %26, %28 : vector<2x4x256xf32>
    %c0_14 = arith.constant 0 : index
    %c0_15 = arith.constant 0 : index
    %c0_16 = arith.constant 0 : index
    %30 = vector.load %arg3[%c0_14, %c0_15, %c0_16] : memref<2x4x256xf32, #tpu.memory_space<vmem>>, vector<2x4x256xf32>
    tpu.vector_store %arg3[%c0_14, %c0_15, %c0_16], %29 {strides = array<i32>} : memref<2x4x256xf32, #tpu.memory_space<vmem>>, vector<2x4x256xf32>,
    return
  }
  func.func @transform_0(%arg0: i32) -> (i32, i32, i32) {
    %c0_i32 = arith.constant 0 : i32
    %c0_i32_0 = arith.constant 0 : i32
    %c0_i32_1 = arith.constant 0 : i32
    return %arg0, %c0_i32, %c0_i32_0 : i32, i32, i32
  }
  func.func @transform_1(%arg0: i32) -> (i32, i32) {
    %c0_i32 = arith.constant 0 : i32
    %c0_i32_0 = arith.constant 0 : i32
    %c0_i32_1 = arith.constant 0 : i32
    return %c0_i32, %c0_i32_0 : i32, i32
  }
  func.func @transform_2(%arg0: i32) -> (i32, i32, i32) {
    %c0_i32 = arith.constant 0 : i32
    %c0_i32_0 = arith.constant 0 : i32
    %c0_i32_1 = arith.constant 0 : i32
    return %arg0, %c0_i32, %c0_i32_0 : i32, i32, i32
  }
}

</mosaic_0001>

<llo_original>
// kernel: tpu_custom_call.1
$region0: #{tpu_custom_call.1}
  #allocation0 [shape = 'u32[]', space=smem, size = 0x4, offset = 0x4, fixed_abs, tag = 'smem constant byte address 0x4 - core index']
  #allocation1 [shape = 'u32[144,128]{1,0:T(1,128)}', space=vmem, size = 0x12000, scoped, tag = 'internal scratch']
  %s0 = inlined_call_operand.hbm [shape: f32[2,4,256], index: 0, kind: input, shape index: {}]
  %s1 = inlined_call_operand.hbm [shape: f32[4,8], index: 1, kind: input, shape index: {}]
  %s2 = inlined_call_operand.hbm [shape: f32[2,4,256], index: 2, kind: output, shape index: {}]
  %s3 = sld [smem:[#allocation0]]
  $region26: #{tpu_custom_call.1} parent=0
    _
  %s5 = ssub.s32 1, %s3
  %s6 = scalar_select 0, %s5, %s3
  $region1: #{tpu_custom_call.1} parent=0
    #allocation2 [shape = 'u8[8192]{0}', space=vmem, size = 0x2000, scoped, tag = 'input window, operand 0, single buffered']
    #allocation3 [shape = 's32[1]{0}', space=sflag, size = 0x4, scoped, tag = 'scoped memory for tpu_custom_call.1']
    #allocation4 [shape = 's32[1]{0}', space=sflag, size = 0x4, scoped, tag = 'scoped memory for tpu_custom_call.1']
    #allocation5 [shape = 'u8[2048]{0}', space=vmem, size = 0x800, scoped, tag = 'input window, operand 1, single buffered']
    #allocation6 [shape = 's32[1]{0}', space=sflag, size = 0x4, scoped, tag = 'scoped memory for tpu_custom_call.1']
    #allocation7 [shape = 'u8[8192]{0}', space=vmem, size = 0x2000, scoped, tag = 'output window, operand 0, single buffered']
    %7 = vsyncpa [#allocation3], 0
    %8 = vsyncpa [#allocation6], 0
    %9 = vsyncpa [#allocation4], 0
    // Predicated region
    $region2: #{tpu_custom_call.1} parent=1 // pred_check
      _
    $region3: #{tpu_custom_call.1} parent=1 // pred_check_branch
      %11 = sbr.rel (0) target = $region5
    $region4: #{tpu_custom_call.1} parent=1 // pred_region
      %s13 = ssub.s32 256, 256
      %14 = vsyncadd [#allocation3], %s13
      %s15 = sshll.u32 [#allocation2], 4
      %s16 = int_to_ptr.vmem [resolvable:$true] %s15
      %21 = dma.hbm_to_vmem [thread:$0]  %s0, 256, %s16, [#allocation3], 128, 128, 8
    $region5: #{tpu_custom_call.1} parent=1 // pred_fallthru
      _
    // Predicated region
    $region6: #{tpu_custom_call.1} parent=1 // pred_check
      _
    $region7: #{tpu_custom_call.1} parent=1 // pred_check_branch
      %23 = sbr.rel (0) target = $region9
    $region8: #{tpu_custom_call.1} parent=1 // pred_region
      %s25 = ssub.s32 64, 64
      %26 = vsyncadd [#allocation6], %s25
      %s28 = sshll.u32 [#allocation5], 4
      %s29 = int_to_ptr.vmem [resolvable:$true] %s28
      %31 = dma.hbm_to_vmem [thread:$0]  %s1, 64, %s29, [#allocation6]
    $region9: #{tpu_custom_call.1} parent=1 // pred_fallthru
      _
    // Predicated region
    $region10: #{tpu_custom_call.1} parent=1 // pred_check
      _
    $region11: #{tpu_custom_call.1} parent=1 // pred_check_branch
      %33 = sbr.rel (0) target = $region13
    $region12: #{tpu_custom_call.1} parent=1 // pred_region
      %34 = dma.done [#allocation3], 256
    $region13: #{tpu_custom_call.1} parent=1 // pred_fallthru
      _
    // Predicated region
    $region14: #{tpu_custom_call.1} parent=1 // pred_check
      _
    $region15: #{tpu_custom_call.1} parent=1 // pred_check_branch
      %36 = sbr.rel (0) target = $region17
    $region16: #{tpu_custom_call.1} parent=1 // pred_region
      %37 = dma.done [#allocation6], 64
    $region17: #{tpu_custom_call.1} parent=1 // pred_fallthru
      _
    %v38 = vld [vmem:[#allocation2] sm:$0xff]
    %v39 = vld [vmem:[#allocation2 + $0x8] sm:$0xff]
    %v42 = vcombine.high %v38, %v38
    %v43 = vcombine.high %v39, %v39
    %vm46 = vcmask 1043456
    %v47 = vsel %vm46, %v38, 0.0
    %v48 = vsel %vm46, %v42, 0.0
    %v49 = vadd.f32 %v47, %v48
    %50 = vadd.xlane.f32.xlu0 %v49
    %v51 = vpop.xlane.xlu0 %50
    %v52 = vsel %vm46, %v39, 0.0
    %v53 = vsel %vm46, %v43, 0.0
    %v54 = vadd.f32 %v52, %v53
    %55 = vadd.xlane.f32.xlu0 %v54
    %v56 = vpop.xlane.xlu0 %55
    %v57 = vmul.f32 %v51, 0.00390625
    %v58 = vmul.f32 %v56, 0.00390625
    %v59 = vld [vmem:[#allocation5] sm:$0xf]
    %v60 = vmul.f32 %v57, %v59
    %v61 = vmul.f32 %v58, %v59
    %vm62 = vcmask 27648
    %v63 = vsel %vm62, %v60, 0.0
    %v64 = vrot.slane %v63, 4
    %v65 = vadd.f32 %v63, %v64
    %v66 = vrot.slane %v65, 2
    %v67 = vadd.f32 %v65, %v66
    %v68 = vrot.slane %v67, 1
    %v69 = vadd.f32 %v67, %v68
    %v70 = vsel %vm62, %v61, 0.0
    %v71 = vrot.slane %v70, 4
    %v72 = vadd.f32 %v70, %v71
    %v73 = vrot.slane %v72, 2
    %v74 = vadd.f32 %v72, %v73
    %v75 = vrot.slane %v74, 1
    %v76 = vadd.f32 %v74, %v75
    %v77 = vmax.f32 %v69, 0.0
    %v78 = vmax.f32 %v76, 0.0
    %81 = vrot.lane.b32.xlu0 %v77, 4
    %v82 = vpop.permute.xlu0 %81
    %83 = vrot.lane.b32.xlu0 %v78, 4
    %v84 = vpop.permute.xlu0 %83
    %v87 = vmul.f32 %v59, %v82
    %v88 = vmul.f32 %v59, %v84
    %91 = vrot.lane.b32.xlu0 %v87, 124
    %v92 = vpop.permute.xlu0 %91
    %93 = vrot.lane.b32.xlu0 %v88, 124
    %v94 = vpop.permute.xlu0 %93
    %v97 = vsel %vm62, %v92, 0.0
    %98 = vadd.xlane.f32.xlu0 %v97
    %v99 = vpop.xlane.xlu0 %98
    %v100 = vsel %vm62, %v94, 0.0
    %101 = vadd.xlane.f32.xlu0 %v100
    %v102 = vpop.xlane.xlu0 %101
    %v103 = vsub.f32 0.0, %v99
    %v104 = vsub.f32 0.0, %v102
    %v105 = vmul.f32 %v103, 1.442695
    %v106 = vpow.pop %v105
    %v107 = vmul.f32 %v104, 1.442695
    %v108 = vpow.pop %v107
    %v109 = vadd.f32 %v106, 1.0
    %v110 = vadd.f32 %v108, 1.0
    %v111 = vrcp.pop %v109
    %v112 = vrcp.pop %v110
    %v116 = vunpack.c.l.s4 839922192
    %v117 = vunpack.c.0.s8 %v116
    %v118 = vlaneseq
    %v119 = vshrl.u32 %v118, 7
    %v120 = vsub.s32 %v117, %v119
    %v121 = vrot.slane %v111, %v120
    %v123 = vunpack.c.l.s4 839922192
    %v124 = vunpack.c.0.s8 %v123
    %v125 = vlaneseq
    %v126 = vshrl.u32 %v125, 7
    %v127 = vsub.s32 %v124, %v126
    %v128 = vrot.slane %v112, %v127
    %v131 = vmul.f32 %v38, %v121
    %v132 = vmul.f32 %v39, %v128
    %133 = vst [vmem:[#allocation7] sm:$0xff] %v131
    %134 = vst [vmem:[#allocation7 + $0x8] sm:$0xff] %v132
    // Predicated region
    $region18: #{tpu_custom_call.1} parent=1 // pred_check
      _
    $region19: #{tpu_custom_call.1} parent=1 // pred_check_branch
      %136 = sbr.rel (0) target = $region21
    $region20: #{tpu_custom_call.1} parent=1 // pred_region
      %s138 = ssub.s32 256, 256
      %139 = vsyncadd [#allocation4], %s138
      %s140 = sshll.u32 [#allocation7], 4
      %s141 = int_to_ptr.vmem [resolvable:$true] %s140
      %146 = dma.vmem_to_hbm [thread:$0]  %s141, 256, %s2, [#allocation4], 128, 128, 8
    $region21: #{tpu_custom_call.1} parent=1 // pred_fallthru
      _
    // Predicated region
    $region22: #{tpu_custom_call.1} parent=1 // pred_check
      _
    $region23: #{tpu_custom_call.1} parent=1 // pred_check_branch
      %148 = sbr.rel (0) target = $region25
    $region24: #{tpu_custom_call.1} parent=1 // pred_region
      %149 = dma.done [#allocation4], 256
    $region25: #{tpu_custom_call.1} parent=1 // pred_fallthru
      _
    %150 = vsyncpa [#allocation3], 1
    %151 = vsyncpa [#allocation6], 1
    %152 = vsyncpa [#allocation4], 1

</llo_original>
